<compile_context>
chip_gen: v7x
topology: tpu7x:2x2x1
jax: 0.10.0
libtpu: 0.0.40
codegen_flags: <defaults>
</compile_context>

<pallas_src>
import functools

import jax
import jax.numpy as jnp
from jax.experimental import pallas as pl
from jax.experimental.pallas import tpu as pltpu


# ---------------------------------------------------------------------------
# Kernels
# ---------------------------------------------------------------------------
def _pl_kernel_f32_out(x_ref, w_ref, b_ref, o_ref):
    # x_ref: (tm, tk) bf16; w_ref: (tk, tn) bf16 (pre-transposed, native MXU
    # layout); b_ref: (1, tn) f32; o_ref: (tm, tn) f32.
    # o_ref's block index ignores k -> it stays resident in VMEM across the
    # K loop and is used directly as the f32 accumulator (no scratch needed).
    k = pl.program_id(2)

    @pl.when(k == 0)
    def _init():
        o_ref[...] = jnp.broadcast_to(b_ref[...], o_ref.shape)

    o_ref[...] += jnp.dot(x_ref[...], w_ref[...],
                          preferred_element_type=jnp.float32)


def _pl_kernel_lowp_out(x_ref, w_ref, b_ref, o_ref, acc_ref):
    # Low-precision (e.g. bf16) output: keep a resident f32 accumulator and
    # add bias + downcast once in the finalize branch.
    k = pl.program_id(2)

    @pl.when(k == 0)
    def _init():
        acc_ref[...] = jnp.zeros_like(acc_ref)

    acc_ref[...] += jnp.dot(x_ref[...], w_ref[...],
                            preferred_element_type=jnp.float32)

    @pl.when(k == pl.num_programs(2) - 1)
    def _finalize():
        o_ref[...] = (acc_ref[...] + b_ref[...]).astype(o_ref.dtype)


# ---------------------------------------------------------------------------
# Tile selection helpers
# ---------------------------------------------------------------------------
def _pick_tile(dim, want, aligns=(128,)):
    """Largest divisor of `dim` that is <= `want` and a multiple of one of
    `aligns` (tried in order); falls back to the full dim (always legal)."""
    if dim <= want:
        return dim
    for align in aligns:
        t = (want // align) * align
        while t >= align:
            if dim % t == 0:
                return t
            t -= align
    return dim


def _vmem_bytes(tm, tn, tk, out_itemsize, use_acc):
    """Estimated VMEM footprint: double-buffered x/w/bias/out + acc scratch."""
    x_bufs = 2 * tm * tk * 2          # bf16
    w_bufs = 2 * tk * tn * 2          # bf16
    b_bufs = 2 * 1 * tn * 4           # f32
    o_bufs = 2 * tm * tn * out_itemsize
    acc = tm * tn * 4 if use_acc else 0
    return x_bufs + w_bufs + b_bufs + o_bufs + acc


# ---------------------------------------------------------------------------
# One-time parameter prep (do this ONCE, outside jit, and persist the result)
# ---------------------------------------------------------------------------
def prepare_parallel_linear_params(weights, biases):
    """weights: (G, Nper, K) -> W: (K, G*Nper) bf16 (pre-transposed, native MXU
    RHS layout); biases: (G, Nper) -> (1, G*Nper) f32. Column ordering matches
    torch.cat([x @ W_g^T], dim=1) (shard-major)."""
    G, Nper, K = weights.shape
    w = jnp.transpose(weights, (2, 0, 1)).reshape(K, G * Nper).astype(jnp.bfloat16)
    b = biases.reshape(1, G * Nper).astype(jnp.float32)
    return w, b


# ---------------------------------------------------------------------------
# Jitted forward
# ---------------------------------------------------------------------------
@functools.partial(jax.jit, static_argnames=("tm", "tn", "tk", "vmem_budget_bytes"))
def parallel_linear(x, w, b, *, tm=2048, tn=1024, tk=1024,
                    vmem_budget_bytes=40 * 1024 * 1024):
    """y = x @ W + b with W = concat_g(W_g^T, axis=1) already prepared.

    x: (M, K); w: (K, N) bf16; b: (1, N) f32 -> y: (M, N) in x.dtype.
    """
    M, K = x.shape
    Kw, N = w.shape
    assert K == Kw, (K, Kw)
    out_dtype = x.dtype
    out_itemsize = jnp.dtype(out_dtype).itemsize
    use_acc = out_dtype != jnp.float32   # f32 outputs accumulate in-place

    # x is small relative to W; cast here if caller didn't pass bf16 already.
    x_bf = x if x.dtype == jnp.bfloat16 else x.astype(jnp.bfloat16)

    # --- tile selection (static, shape-dependent) ---------------------------
    tm = _pick_tile(M, tm, aligns=(256, 128, 16, 8))
    tn = _pick_tile(N, tn, aligns=(256, 128))
    tk = _pick_tile(K, tk, aligns=(128,))

    # Keep the parallel grid >= 2 steps so both v7x TensorCores get work on
    # small-M (decode-style) shapes.  v5e/v6e unaffected.
    while ((M // tm) * (N // tn) < 2 and tn > 256
           and N % (tn // 2) == 0 and (tn // 2) % 128 == 0):
        tn //= 2

    # VMEM budget guard (v7x: 64 MiB physical is the binding constraint).
    # Shrink tk first (doesn't hurt intensity), then tn, then tm.
    while not _vmem_bytes(tm, tn, tk, out_itemsize, use_acc) <= vmem_budget_bytes:
        if tk > 512 and K % (tk // 2) == 0:
            tk //= 2
        elif tn > 512 and N % (tn // 2) == 0:
            tn //= 2
        elif tm > 256 and M % (tm // 2) == 0:
            tm //= 2
        else:
            break

    assert M % tm == 0 and N % tn == 0 and K % tk == 0, (M, N, K, tm, tn, tk)
    grid = (M // tm, N // tn, K // tk)   # K reduction axis LAST ("arbitrary")

    cost = pl.CostEstimate(
        flops=2 * M * N * K,
        transcendentals=0,
        bytes_accessed=((M // tm) * N * K * 2      # weight re-streaming
                        + (N // tn) * M * K * 2    # activation re-streaming
                        + M * N * out_itemsize     # output write
                        + N * 4),                  # bias
    )

    in_specs = [
        pl.BlockSpec((tm, tk), lambda i, j, k: (i, k)),   # x tile
        pl.BlockSpec((tk, tn), lambda i, j, k: (k, j)),   # weight tile (K, N)
        pl.BlockSpec((1, tn), lambda i, j, k: (0, j)),    # bias tile
    ]
    out_spec = pl.BlockSpec((tm, tn), lambda i, j, k: (i, j))

    kernel = _pl_kernel_lowp_out if use_acc else _pl_kernel_f32_out
    scratch = [pltpu.VMEM((tm, tn), jnp.float32)] if use_acc else []

    return pl.pallas_call(
        kernel,
        out_shape=jax.ShapeDtypeStruct((M, N), out_dtype),
        grid_spec=pltpu.PrefetchScalarGridSpec(
            num_scalar_prefetch=0,
            grid=grid,
            in_specs=in_specs,
            out_specs=out_spec,
            scratch_shapes=scratch,
        ),
        compiler_params=pltpu.CompilerParams(
            dimension_semantics=("parallel", "parallel", "arbitrary"),
            vmem_limit_bytes=48 * 1024 * 1024,
        ),
        cost_estimate=cost,
    )(x_bf, w, b)


# ---------------------------------------------------------------------------
# Demo / self-test
# ---------------------------------------------------------------------------
if __name__ == "__main__":
    batch = 8
    in_features = 512
    out_features = 512
    num_gpus = 2
    out_per_gpu = out_features // num_gpus

    key = jax.random.PRNGKey(0)
    kx, kw = jax.random.split(key)

    x = jax.random.normal(kx, (batch, in_features), dtype=jnp.float32)
    # Deterministic init mirroring the module: randn weights, zero biases.
    weights = jax.random.normal(
        kw, (num_gpus, out_per_gpu, in_features), dtype=jnp.float32)
    biases = jnp.zeros((num_gpus, out_per_gpu), dtype=jnp.float32)

    # One-time weight prep (persisted, outside the jitted call).
    w_prep, b_prep = prepare_parallel_linear_params(weights, biases)

    # Small tiles so the tiny demo still exercises N tiling and K accumulation
    # (grid = (1, 2, 2)); defaults are sized for realistic layer dims.
    out = parallel_linear(x, w_prep, b_prep, tm=8, tn=256, tk=256)
    out = jax.block_until_ready(out)

    # Reference mirroring the torch module: per-shard F.linear, then concat
    # along dim 1, computed with the same bf16-in / f32-accumulate recipe.
    x_bf = x.astype(jnp.bfloat16)
    shard_outs = []
    for g in range(num_gpus):
        w_bf = weights[g].astype(jnp.bfloat16)
        shard_outs.append(
            jnp.dot(x_bf, w_bf.T, preferred_element_type=jnp.float32)
            + biases[g][None, :])
    ref = jnp.concatenate(shard_outs, axis=1).astype(x.dtype)

    assert out.shape == (batch, out_features), out.shape
    max_err = float(jnp.max(jnp.abs(out - ref)))
    assert jnp.allclose(out, ref, atol=2e-2, rtol=2e-2), f"max err {max_err}"
    print("KERNEL_OK")
</pallas_src>

<mosaic_0001>
module attributes {stable_mosaic.version = 11 : i64} {
  func.func @_pl_kernel_f32_out(%arg0: i32, %arg1: i32, %arg2: i32, %arg3: memref<8x256xbf16, #tpu.memory_space<vmem>>, %arg4: memref<256x256xbf16, #tpu.memory_space<vmem>>, %arg5: memref<1x256xf32, #tpu.memory_space<vmem>>, %arg6: memref<8x256xf32, #tpu.memory_space<vmem>>) attributes {dimension_semantics = [#tpu.dimension_semantics<parallel>, #tpu.dimension_semantics<parallel>, #tpu.dimension_semantics<arbitrary>], iteration_bounds = array<i64: 1, 2, 2>, scalar_prefetch = 0 : i64, scratch_operands = 0 : i64, tpu.core_type = #tpu.core_type<tc>, window_params = [{transform_indices = @transform_0, window_bounds = array<i64: 8, 256>}, {transform_indices = @transform_1, window_bounds = array<i64: 256, 256>}, {transform_indices = @transform_2, window_bounds = array<i64: 1, 256>}, {transform_indices = @transform_3, window_bounds = array<i64: 8, 256>}]} {
    %c0_i32 = arith.constant 0 : i32
    %0 = arith.cmpi eq, %arg2, %c0_i32 : i32
    %1 = arith.extui %0 : i1 to i32
    %c0_i32_0 = arith.constant 0 : i32
    %2 = arith.cmpi ne, %1, %c0_i32_0 : i32
    scf.if %2 {
      %c0_8 = arith.constant 0 : index
      %c0_9 = arith.constant 0 : index
      %9 = vector.load %arg5[%c0_8, %c0_9] : memref<1x256xf32, #tpu.memory_space<vmem>>, vector<1x256xf32>
      %10 = vector.shape_cast %9 : vector<1x256xf32> to vector<1x256xf32>
      %11 = vector.broadcast %10 : vector<1x256xf32> to vector<8x256xf32>
      %c0_10 = arith.constant 0 : index
      %c0_11 = arith.constant 0 : index
      %12 = vector.load %arg6[%c0_10, %c0_11] : memref<8x256xf32, #tpu.memory_space<vmem>>, vector<8x256xf32>
      tpu.vector_store %arg6[%c0_10, %c0_11], %11 {strides = array<i32>} : memref<8x256xf32, #tpu.memory_space<vmem>>, vector<8x256xf32>,
    } else {
    }
    %c0 = arith.constant 0 : index
    %c0_1 = arith.constant 0 : index
    %3 = vector.load %arg6[%c0, %c0_1] : memref<8x256xf32, #tpu.memory_space<vmem>>, vector<8x256xf32>
    %c0_2 = arith.constant 0 : index
    %c0_3 = arith.constant 0 : index
    %4 = vector.load %arg3[%c0_2, %c0_3] : memref<8x256xbf16, #tpu.memory_space<vmem>>, vector<8x256xbf16>
    %c0_4 = arith.constant 0 : index
    %c0_5 = arith.constant 0 : index
    %5 = vector.load %arg4[%c0_4, %c0_5] : memref<256x256xbf16, #tpu.memory_space<vmem>>, vector<256x256xbf16>
    %cst = arith.constant dense<0.000000e+00> : vector<8x256xf32>
    %6 = tpu.matmul %4, %5, %cst {dimension_numbers = #tpu.dot_dimension_numbers<[1], [0], [0], [1], [0, 0, 1, 1], [], []>} : vector<8x256xbf16>, vector<256x256xbf16>, vector<8x256xf32> -> vector<8x256xf32>
    %7 = arith.addf %3, %6 : vector<8x256xf32>
    %c0_6 = arith.constant 0 : index
    %c0_7 = arith.constant 0 : index
    %8 = vector.load %arg6[%c0_6, %c0_7] : memref<8x256xf32, #tpu.memory_space<vmem>>, vector<8x256xf32>
    tpu.vector_store %arg6[%c0_6, %c0_7], %7 {strides = array<i32>} : memref<8x256xf32, #tpu.memory_space<vmem>>, vector<8x256xf32>,
    return
  }
  func.func @transform_0(%arg0: i32, %arg1: i32, %arg2: i32) -> (i32, i32) {
    %c0_i32 = arith.constant 0 : i32
    return %arg0, %arg2 : i32, i32
  }
  func.func @transform_1(%arg0: i32, %arg1: i32, %arg2: i32) -> (i32, i32) {
    %c0_i32 = arith.constant 0 : i32
    return %arg2, %arg1 : i32, i32
  }
  func.func @transform_2(%arg0: i32, %arg1: i32, %arg2: i32) -> (i32, i32) {
    %c0_i32 = arith.constant 0 : i32
    %c0_i32_0 = arith.constant 0 : i32
    return %c0_i32, %arg1 : i32, i32
  }
  func.func @transform_3(%arg0: i32, %arg1: i32, %arg2: i32) -> (i32, i32) {
    %c0_i32 = arith.constant 0 : i32
    return %arg0, %arg1 : i32, i32
  }
}

</mosaic_0001>

<llo_original>
// kernel: parallel_linear.1
$region0: #{parallel_linear.1}
  #allocation0 [shape = 'u32[]', space=smem, size = 0x4, offset = 0x4, fixed_abs, tag = 'smem constant byte address 0x4 - core index']
  #allocation1 [shape = 'u32[144,128]{1,0:T(1,128)}', space=vmem, size = 0x12000, scoped, tag = 'internal scratch']
  %s0 = inlined_call_operand.vmem [shape: bf16[8,512], index: 0, kind: input, shape index: {}]
  %s1 = inlined_call_operand.hbm [shape: bf16[512,512], index: 1, kind: input, shape index: {}]
  %s2 = inlined_call_operand.vmem [shape: f32[1,512], index: 2, kind: input, shape index: {}]
  %s3 = inlined_call_operand.hbm [shape: f32[8,512], index: 3, kind: output, shape index: {}]
  %s4 = sld [smem:[#allocation0]]
  $region53: #{parallel_linear.1} parent=0
    _
  %s6 = ssub.s32 1, %s4
  %s7 = scalar_select 0, %s6, %s4
  $region1: #{parallel_linear.1} parent=0
    #allocation2 [shape = 'u8[262144]{0}', space=vmem, size = 0x40000, scoped, tag = 'input window, operand 1']
    #allocation3 [shape = 's32[2]{0}', space=sflag, size = 0x8, scoped, tag = 'scoped memory for parallel_linear.1']
    #allocation4 [shape = 's32[2]{0}', space=sflag, size = 0x8, scoped, tag = 'scoped memory for parallel_linear.1']
    #allocation5 [shape = 'u8[16384]{0}', space=vmem, size = 0x4000, scoped, tag = 'output window, operand 0']
    %8 = vsyncpa [#allocation3], 0
    %s9 = scalar_lea.sflag [#allocation3], 1
    %10 = vsyncpa %s9, 0
    %11 = vsyncpa [#allocation4], 0
    %s12 = scalar_lea.sflag [#allocation4], 1
    %13 = vsyncpa %s12, 0
    loop: start=0, step=1, limit=6
    $region2: #{parallel_linear.1} parent=1 // loop_pre_header
      _
    $region3: #{parallel_linear.1} parent=1 // loop_header
      %s15 = sphi 0, %s19
      %p16 = scmp.ge.s32.totalorder %s15, 6
      %s22 = sphi 0, %s41
      %s23 = sphi 0, %s37
      %s24 = sphi 0, %s33
      %s25 = sphi 0, %s22
      %s26 = sphi 0, %s23
      %s27 = sphi 0, %s24
      %s28 = sphi 0, %s25
      %s29 = sphi 0, %s26
      %s30 = sphi 0, %s27
      %s46 = sphi 0, %s48
      %s49 = sphi 0, %s46
      %s50 = sphi 0, %s49
      %s66 = sphi 0, %s50
      %s74 = sphi 0, %s76
      %s77 = sphi 0, %s74
      %s78 = sphi 0, %s77
      %s94 = sphi 0, %s78
      %s100 = sphi 0, %s102
      %s103 = sphi 0, %s100
      %s104 = sphi 0, %s103
      %s120 = sphi 0, %s104
      %s128 = sphi 0, %s130
      %s131 = sphi 0, %s128
      %s132 = sphi 0, %s131
      %s148 = sphi 0, %s132
    $region4: #{parallel_linear.1} parent=1 // loop_header_branch
      %18 = sbr.rel (%p16) target = $region8
    $region5: #{parallel_linear.1} parent=1 // loop_body
      %s20 = ssub.s32 %s15, 1
      %s21 = ssub.s32 %s15, 2
      %s31 = sadd.s32 1, %s24
      %p32 = scmp.ge.s32.totalorder %s31, 2
      %s33 = scalar_select %p32, 0, %s31
      %s34 = sadd.s32 1, %s23
      %s35 = scalar_select %p32, %s34, %s23
      %p36 = scmp.ge.s32.totalorder %s35, 2
      %s37 = scalar_select %p36, 0, %s35
      %s38 = sadd.s32 1, %s22
      %s39 = scalar_select %p36, %s38, %s22
      %p40 = scmp.ge.s32.totalorder %s39, 1
      %s41 = scalar_select %p40, 0, %s39
      %s42 = ssub.s32 %s22, %s41
      %s43 = ssub.s32 %s24, %s33
      %s44 = sor.u32 %s42, %s43
      %p45 = scmp.eq.s32.totalorder %s44, 0
      %s47 = sadd.s32 %s46, 1
      %s48 = scalar_select %p45, %s46, %s47
      %p51 = pneg %p45
      %p52 = scmp.eq.s32.totalorder %s15, 3
      %p53 = por %p51, %p52
      %p54 = scmp.ne.s32.totalorder %s46, %s49
      %p55 = scmp.eq.s32.totalorder %s15, 0
      %p56 = por %p54, %p55
      %p57 = scmp.ne.s32.totalorder %s46, %s49
      %p58 = scmp.eq.s32.totalorder %s20, 3
      %p59 = por %p57, %p58
      %p60 = scmp.ne.s32.totalorder %s49, %s50
      %p61 = scmp.eq.s32.totalorder %s20, 0
      %p62 = por %p60, %p61
      %p63 = scmp.ne.s32.totalorder %s49, %s50
      %p64 = scmp.eq.s32.totalorder %s21, 3
      %p65 = por %p63, %p64
      %p67 = scmp.ne.s32.totalorder %s50, %s66
      %p68 = scmp.eq.s32.totalorder %s21, 0
      %p69 = por %p67, %p68
      %s70 = ssub.s32 %s24, %s33
      %s71 = ssub.s32 %s23, %s37
      %s72 = sor.u32 %s70, %s71
      %p73 = scmp.eq.s32.totalorder %s72, 0
      %s75 = sadd.s32 %s74, 1
      %s76 = scalar_select %p73, %s74, %s75
      %p79 = pneg %p73
      %p80 = scmp.eq.s32.totalorder %s15, 3
      %p81 = por %p79, %p80
      %p82 = scmp.ne.s32.totalorder %s74, %s77
      %p83 = scmp.eq.s32.totalorder %s15, 0
      %p84 = por %p82, %p83
      %p85 = scmp.ne.s32.totalorder %s74, %s77
      %p86 = scmp.eq.s32.totalorder %s20, 3
      %p87 = por %p85, %p86
      %p88 = scmp.ne.s32.totalorder %s77, %s78
      %p89 = scmp.eq.s32.totalorder %s20, 0
      %p90 = por %p88, %p89
      %p91 = scmp.ne.s32.totalorder %s77, %s78
      %p92 = scmp.eq.s32.totalorder %s21, 3
      %p93 = por %p91, %p92
      %p95 = scmp.ne.s32.totalorder %s78, %s94
      %p96 = scmp.eq.s32.totalorder %s21, 0
      %p97 = por %p95, %p96
      %s98 = ssub.s32 %s23, %s37
      %p99 = scmp.eq.s32.totalorder %s98, 0
      %s101 = sadd.s32 %s100, 1
      %s102 = scalar_select %p99, %s100, %s101
      %p105 = pneg %p99
      %p106 = scmp.eq.s32.totalorder %s15, 3
      %p107 = por %p105, %p106
      %p108 = scmp.ne.s32.totalorder %s100, %s103
      %p109 = scmp.eq.s32.totalorder %s15, 0
      %p110 = por %p108, %p109
      %p111 = scmp.ne.s32.totalorder %s100, %s103
      %p112 = scmp.eq.s32.totalorder %s20, 3
      %p113 = por %p111, %p112
      %p114 = scmp.ne.s32.totalorder %s103, %s104
      %p115 = scmp.eq.s32.totalorder %s20, 0
      %p116 = por %p114, %p115
      %p117 = scmp.ne.s32.totalorder %s103, %s104
      %p118 = scmp.eq.s32.totalorder %s21, 3
      %p119 = por %p117, %p118
      %p121 = scmp.ne.s32.totalorder %s104, %s120
      %p122 = scmp.eq.s32.totalorder %s21, 0
      %p123 = por %p121, %p122
      %s124 = ssub.s32 %s22, %s41
      %s125 = ssub.s32 %s23, %s37
      %s126 = sor.u32 %s124, %s125
      %p127 = scmp.eq.s32.totalorder %s126, 0
      %s129 = sadd.s32 %s128, 1
      %s130 = scalar_select %p127, %s128, %s129
      %p133 = pneg %p127
      %p134 = scmp.eq.s32.totalorder %s15, 3
      %p135 = por %p133, %p134
      %p136 = scmp.ne.s32.totalorder %s128, %s131
      %p137 = scmp.eq.s32.totalorder %s15, 0
      %p138 = por %p136, %p137
      %p139 = scmp.ne.s32.totalorder %s128, %s131
      %p140 = scmp.eq.s32.totalorder %s20, 3
      %p141 = por %p139, %p140
      %p142 = scmp.ne.s32.totalorder %s131, %s132
      %p143 = scmp.eq.s32.totalorder %s20, 0
      %p144 = por %p142, %p143
      %p145 = scmp.ne.s32.totalorder %s131, %s132
      %p146 = scmp.eq.s32.totalorder %s21, 3
      %p147 = por %p145, %p146
      %p149 = scmp.ne.s32.totalorder %s132, %s148
      %p150 = scmp.eq.s32.totalorder %s21, 0
      %p151 = por %p149, %p150
      %p152 = scmp.le.s32.totalorder 1, %s15
      %p153 = scmp.lt.s32.totalorder %s15, 5
      %p154 = pnand %p152, %p153
      %p155 = pneg %p154
      // Predicated region
      $region9: #{parallel_linear.1} parent=5 // pred_check
        _
      $region10: #{parallel_linear.1} parent=5 // pred_check_branch
        %157 = sbr.rel (%p154) target = $region12
      $region11: #{parallel_linear.1} parent=5 // pred_region
        %s158 = ssub.s32 %s15, 1
      $region12: #{parallel_linear.1} parent=5 // pred_fallthru
        _
      %p159 = scmp.lt.s32.totalorder %s15, 4
      // Predicated region
      $region13: #{parallel_linear.1} parent=5 // pred_check
        %p160 = pneg %p159
      $region14: #{parallel_linear.1} parent=5 // pred_check_branch
        %162 = sbr.rel (%p160) target = $region16
      $region15: #{parallel_linear.1} parent=5 // pred_region
        // Predicated region
        $region17: #{parallel_linear.1} parent=15 // pred_check
          %p163 = pneg %p56
        $region18: #{parallel_linear.1} parent=15 // pred_check_branch
          %165 = sbr.rel (%p163) target = $region20
        $region19: #{parallel_linear.1} parent=15 // pred_region
          %s166 = smul.u32 2, %s24
          %p167 = scmp.lt.s32.totalorder %s22, 0
          %s168 = scalar_select %p167, %s22, 0
          %p169 = scmp.lt.s32.totalorder %s166, 3
          %s170 = scalar_select %p169, %s166, 3
          %s171 = smul.addr %s168, 4
          %s172 = sadd.s32 %s170, %s171
          %s173 = smul.addr %s172, 4
          %s174 = scalar_lea.vmem %s0, %s173
          %s175 = smul.u32 2, %s24
        $region20: #{parallel_linear.1} parent=15 // pred_fallthru
          _
        // Predicated region
        $region21: #{parallel_linear.1} parent=15 // pred_check
          %p176 = pneg %p84
        $region22: #{parallel_linear.1} parent=15 // pred_check_branch
          %178 = sbr.rel (%p176) target = $region24
        $region23: #{parallel_linear.1} parent=15 // pred_region
          %s179 = sand.u32 %s74, 1
          %s180 = scalar_lea.sflag [#allocation3], %s179
          %s181 = sand.u32 %s74, 1
          %s182 = smul.addr %s181, 256
          %s183 = scalar_lea.vmem [#allocation2], %s182
          %s184 = smul.u32 32, %s24
          %s185 = smul.u32 2, %s23
          %s187 = ssub.s32 4096, 4096
          %188 = vsyncadd %s180, %s187
          %s189 = smul.addr %s184, 4
          %s190 = sadd.s32 %s185, %s189
          %s191 = smul.addr %s190, 64
          %s192 = scalar_lea.hbm %s1, %s191
          %s193 = sshll.u32 %s183, 4
          %s194 = int_to_ptr.vmem [resolvable:$true] %s193
          %199 = dma.hbm_to_vmem [thread:$0]  %s192, 4096, %s194, %s180, 256, 128, 8
        $region24: #{parallel_linear.1} parent=15 // pred_fallthru
          _
        // Predicated region
        $region25: #{parallel_linear.1} parent=15 // pred_check
          %p200 = pneg %p110
        $region26: #{parallel_linear.1} parent=15 // pred_check_branch
          %202 = sbr.rel (%p200) target = $region28
        $region27: #{parallel_linear.1} parent=15 // pred_region
          %s203 = smul.u32 2, %s23
          %p204 = scmp.lt.s32.totalorder %s203, 3
          %s205 = scalar_select %p204, %s203, 3
          %s206 = scalar_lea.vmem %s2, %s205
          %s207 = smul.u32 2, %s23
        $region28: #{parallel_linear.1} parent=15 // pred_fallthru
          _
      $region16: #{parallel_linear.1} parent=5 // pred_fallthru
        _
      %p208 = scmp.le.s32.totalorder 1, %s15
      %p209 = scmp.lt.s32.totalorder %s15, 5
      %p210 = pnand %p208, %p209
      %p211 = pneg %p210
      // Predicated region
      $region29: #{parallel_linear.1} parent=5 // pred_check
        _
      $region30: #{parallel_linear.1} parent=5 // pred_check_branch
        %213 = sbr.rel (%p210) target = $region32
      $region31: #{parallel_linear.1} parent=5 // pred_region
        %s214 = ssub.s32 %s15, 1
        %s215 = sand.u32 %s77, 1
        %s216 = scalar_lea.sflag [#allocation3], %s215
        %s217 = sand.u32 %s77, 1
        %s218 = smul.addr %s217, 256
        %s219 = scalar_lea.vmem [#allocation2], %s218
        // Predicated region
        $region33: #{parallel_linear.1} parent=31 // pred_check
          %p220 = pneg %p90
        $region34: #{parallel_linear.1} parent=31 // pred_check_branch
          %222 = sbr.rel (%p220) target = $region36
        $region35: #{parallel_linear.1} parent=31 // pred_region
          %223 = dma.done %s216, 4096
        $region36: #{parallel_linear.1} parent=31 // pred_fallthru
          _
        %s224 = smul.u32 2, %s27
        %p225 = scmp.lt.s32.totalorder %s25, 0
        %s226 = scalar_select %p225, %s25, 0
        %p227 = scmp.lt.s32.totalorder %s224, 3
        %s228 = scalar_select %p227, %s224, 3
        %s229 = smul.addr %s226, 4
        %s230 = sadd.s32 %s228, %s229
        %s231 = smul.addr %s230, 4
        %s232 = scalar_lea.vmem %s0, %s231
        %p233 = pneg %p62
        %p234 = pneg %p59
        %s235 = sand.u32 %s77, 1
        %s236 = scalar_lea.sflag [#allocation3], %s235
        %s237 = sand.u32 %s77, 1
        %s238 = smul.addr %s237, 256
        %s239 = scalar_lea.vmem [#allocation2], %s238
        %p240 = pneg %p90
        %p241 = pneg %p87
        %s242 = smul.u32 2, %s26
        %p243 = scmp.lt.s32.totalorder %s242, 3
        %s244 = scalar_select %p243, %s242, 3
        %s245 = scalar_lea.vmem %s2, %s244
        %p246 = pneg %p116
        %p247 = pneg %p113
        %p248 = pneg %p144
        %p249 = pneg %p141
        %s250 = sand.u32 %s131, 1
        %s251 = scalar_lea.sflag [#allocation4], %s250
        %s252 = sand.u32 %s131, 1
        %s253 = smul.addr %s252, 16
        %s254 = scalar_lea.vmem [#allocation5], %s253
        %s255 = smul.u32 2, %s27
        %p256 = scmp.lt.s32.totalorder %s25, 0
        %s257 = scalar_select %p256, %s25, 0
        %p258 = scmp.lt.s32.totalorder %s255, 3
        %s259 = scalar_select %p258, %s255, 3
        %s260 = smul.addr %s257, 4
        %s261 = sadd.s32 %s259, %s260
        %s262 = smul.addr %s261, 4
        %s263 = scalar_lea.vmem %s0, %s262
        %s264 = smul.u32 2, %s27
        %s265 = smul.u32 32, %s27
        %s266 = smul.u32 2, %s26
        %s267 = smul.u32 2, %s26
        %p268 = scmp.lt.s32.totalorder %s267, 3
        %s269 = scalar_select %p268, %s267, 3
        %s270 = scalar_lea.vmem %s2, %s269
        %s271 = smul.u32 2, %s26
        %s272 = smul.u32 2, %s26
        %p273 = scmp.eq.s32.totalorder %s27, 0
        // Predicated region
        $region37: #{parallel_linear.1} parent=31 // pred_check
          %p274 = pneg %p273
        $region38: #{parallel_linear.1} parent=31 // pred_check_branch
          %276 = sbr.rel (%p274) target = $region40
        $region39: #{parallel_linear.1} parent=31 // pred_region
          %v277 = vld [vmem:[%s270] sm:$0x3]
          %v279 = vlaneseq
          %v280 = vshrl.u32 %v279, 7
          %v281 = vsub.s32 0, %v280
          %v282 = vrot.slane %v277, %v281
          %v283 = vlaneseq
          %v284 = vshrl.u32 %v283, 7
          %v285 = vsub.s32 1, %v284
          %v286 = vrot.slane %v277, %v285
          %289 = vst [vmem:[%s254] sm:$0xff] %v282
          %290 = vst [vmem:[%s254 + $0x8] sm:$0xff] %v286
        $region40: #{parallel_linear.1} parent=31 // pred_fallthru
          _
        %v291 = vld [vmem:[%s254] sm:$0xff]
        %v292 = vld [vmem:[%s254 + $0x8] sm:$0xff]
        %v293 = vld [vmem:[%s263] sm:$0xff]
        %v294 = vld [vmem:[%s219] sm:$0xff]
        %v295 = vld [vmem:[%s219 + $0x8] sm:$0xff]
        %v296 = vld [vmem:[%s219 + $0x10] sm:$0xff]
        %v297 = vld [vmem:[%s219 + $0x18] sm:$0xff]
        %v298 = vld [vmem:[%s219 + $0x20] sm:$0xff]
        %v299 = vld [vmem:[%s219 + $0x28] sm:$0xff]
        %v300 = vld [vmem:[%s219 + $0x30] sm:$0xff]
        %v301 = vld [vmem:[%s219 + $0x38] sm:$0xff]
        %v302 = vld [vmem:[%s219 + $0x40] sm:$0xff]
        %v303 = vld [vmem:[%s219 + $0x48] sm:$0xff]
        %v304 = vld [vmem:[%s219 + $0x50] sm:$0xff]
        %v305 = vld [vmem:[%s219 + $0x58] sm:$0xff]
        %v306 = vld [vmem:[%s219 + $0x60] sm:$0xff]
        %v307 = vld [vmem:[%s219 + $0x68] sm:$0xff]
        %v308 = vld [vmem:[%s219 + $0x70] sm:$0xff]
        %v309 = vld [vmem:[%s219 + $0x78] sm:$0xff]
        %v310 = vld [vmem:[%s219 + $0x80] sm:$0xff]
        %v311 = vld [vmem:[%s219 + $0x88] sm:$0xff]
        %v312 = vld [vmem:[%s219 + $0x90] sm:$0xff]
        %v313 = vld [vmem:[%s219 + $0x98] sm:$0xff]
        %v314 = vld [vmem:[%s219 + $0xa0] sm:$0xff]
        %v315 = vld [vmem:[%s219 + $0xa8] sm:$0xff]
        %v316 = vld [vmem:[%s219 + $0xb0] sm:$0xff]
        %v317 = vld [vmem:[%s219 + $0xb8] sm:$0xff]
        %v318 = vld [vmem:[%s219 + $0xc0] sm:$0xff]
        %v319 = vld [vmem:[%s219 + $0xc8] sm:$0xff]
        %v320 = vld [vmem:[%s219 + $0xd0] sm:$0xff]
        %v321 = vld [vmem:[%s219 + $0xd8] sm:$0xff]
        %v322 = vld [vmem:[%s219 + $0xe0] sm:$0xff]
        %v323 = vld [vmem:[%s219 + $0xe8] sm:$0xff]
        %v324 = vld [vmem:[%s219 + $0xf0] sm:$0xff]
        %v325 = vld [vmem:[%s219 + $0xf8] sm:$0xff]
        %v327 = vunpack.c.l.b16 %v293
        %v328 = vunpack.c.h.b16 %v293
        %v329 = vpack.c.b16 %v327, %v327
        %v330 = vpack.c.b16 %v328, %v328
        %v365 = vunpack.c.l.b16 %v294
        %v366 = vunpack.c.h.b16 %v294
        %v367 = vunpack.c.l.b16 %v295
        %v368 = vunpack.c.h.b16 %v295
        %v369 = vunpack.c.l.b16 %v296
        %v370 = vunpack.c.h.b16 %v296
        %v371 = vunpack.c.l.b16 %v297
        %v372 = vunpack.c.h.b16 %v297
        %v373 = vunpack.c.l.b16 %v298
        %v374 = vunpack.c.h.b16 %v298
        %v375 = vunpack.c.l.b16 %v299
        %v376 = vunpack.c.h.b16 %v299
        %v377 = vunpack.c.l.b16 %v300
        %v378 = vunpack.c.h.b16 %v300
        %v379 = vunpack.c.l.b16 %v301
        %v380 = vunpack.c.h.b16 %v301
        %v381 = vunpack.c.l.b16 %v302
        %v382 = vunpack.c.h.b16 %v302
        %v383 = vunpack.c.l.b16 %v303
        %v384 = vunpack.c.h.b16 %v303
        %v385 = vunpack.c.l.b16 %v304
        %v386 = vunpack.c.h.b16 %v304
        %v387 = vunpack.c.l.b16 %v305
        %v388 = vunpack.c.h.b16 %v305
        %v389 = vunpack.c.l.b16 %v306
        %v390 = vunpack.c.h.b16 %v306
        %v391 = vunpack.c.l.b16 %v307
        %v392 = vunpack.c.h.b16 %v307
        %v393 = vunpack.c.l.b16 %v308
        %v394 = vunpack.c.h.b16 %v308
        %v395 = vunpack.c.l.b16 %v309
        %v396 = vunpack.c.h.b16 %v309
        %v397 = vunpack.c.l.b16 %v310
        %v398 = vunpack.c.h.b16 %v310
        %v399 = vunpack.c.l.b16 %v311
        %v400 = vunpack.c.h.b16 %v311
        %v401 = vunpack.c.l.b16 %v312
        %v402 = vunpack.c.h.b16 %v312
        %v403 = vunpack.c.l.b16 %v313
        %v404 = vunpack.c.h.b16 %v313
        %v405 = vunpack.c.l.b16 %v314
        %v406 = vunpack.c.h.b16 %v314
        %v407 = vunpack.c.l.b16 %v315
        %v408 = vunpack.c.h.b16 %v315
        %v409 = vunpack.c.l.b16 %v316
        %v410 = vunpack.c.h.b16 %v316
        %v411 = vunpack.c.l.b16 %v317
        %v412 = vunpack.c.h.b16 %v317
        %v413 = vunpack.c.l.b16 %v318
        %v414 = vunpack.c.h.b16 %v318
        %v415 = vunpack.c.l.b16 %v319
        %v416 = vunpack.c.h.b16 %v319
        %v417 = vunpack.c.l.b16 %v320
        %v418 = vunpack.c.h.b16 %v320
        %v419 = vunpack.c.l.b16 %v321
        %v420 = vunpack.c.h.b16 %v321
        %v421 = vunpack.c.l.b16 %v322
        %v422 = vunpack.c.h.b16 %v322
        %v423 = vunpack.c.l.b16 %v323
        %v424 = vunpack.c.h.b16 %v323
        %v425 = vunpack.c.l.b16 %v324
        %v426 = vunpack.c.h.b16 %v324
        %v427 = vunpack.c.l.b16 %v325
        %v428 = vunpack.c.h.b16 %v325
        %v429 = vpack.c.b16 %v367, %v365
        %v430 = vpack.c.b16 %v368, %v366
        %v431 = vpack.c.b16 %v371, %v369
        %v432 = vpack.c.b16 %v372, %v370
        %v433 = vpack.c.b16 %v375, %v373
        %v434 = vpack.c.b16 %v376, %v374
        %v435 = vpack.c.b16 %v379, %v377
        %v436 = vpack.c.b16 %v380, %v378
        %v437 = vpack.c.b16 %v383, %v381
        %v438 = vpack.c.b16 %v384, %v382
        %v439 = vpack.c.b16 %v387, %v385
        %v440 = vpack.c.b16 %v388, %v386
        %v441 = vpack.c.b16 %v391, %v389
        %v442 = vpack.c.b16 %v392, %v390
        %v443 = vpack.c.b16 %v395, %v393
        %v444 = vpack.c.b16 %v396, %v394
        %v445 = vpack.c.b16 %v399, %v397
        %v446 = vpack.c.b16 %v400, %v398
        %v447 = vpack.c.b16 %v403, %v401
        %v448 = vpack.c.b16 %v404, %v402
        %v449 = vpack.c.b16 %v407, %v405
        %v450 = vpack.c.b16 %v408, %v406
        %v451 = vpack.c.b16 %v411, %v409
        %v452 = vpack.c.b16 %v412, %v410
        %v453 = vpack.c.b16 %v415, %v413
        %v454 = vpack.c.b16 %v416, %v414
        %v455 = vpack.c.b16 %v419, %v417
        %v456 = vpack.c.b16 %v420, %v418
        %v457 = vpack.c.b16 %v423, %v421
        %v458 = vpack.c.b16 %v424, %v422
        %v459 = vpack.c.b16 %v427, %v425
        %v460 = vpack.c.b16 %v428, %v426
        %493 = vmatprep.subr.bf16.mxu0 %v430
        %494 = vmatpush1.bf16.msra.mxu0 %v429
        %495 = vmatprep.subr.bf16.mxu0 %v432
        %496 = vmatpush1.bf16.msra.mxu0 %v431
        %497 = vmatprep.subr.bf16.mxu0 %v434
        %498 = vmatpush1.bf16.msra.mxu0 %v433
        %499 = vmatprep.subr.bf16.mxu0 %v436
        %500 = vmatpush1.bf16.msra.mxu0 %v435
        %501 = vmatprep.subr.bf16.mxu0 %v438
        %502 = vmatpush1.bf16.msra.mxu0 %v437
        %503 = vmatprep.subr.bf16.mxu0 %v440
        %504 = vmatpush1.bf16.msra.mxu0 %v439
        %505 = vmatprep.subr.bf16.mxu0 %v442
        %506 = vmatpush1.bf16.msra.mxu0 %v441
        %507 = vmatprep.subr.bf16.mxu0 %v444
        %508 = vmatpush1.bf16.msra.mxu0 %v443
        %509 = vmatprep.subr.bf16.mxu0 %v446
        %510 = vmatpush1.bf16.msra.mxu0 %v445
        %511 = vmatprep.subr.bf16.mxu0 %v448
        %512 = vmatpush1.bf16.msra.mxu0 %v447
        %513 = vmatprep.subr.bf16.mxu0 %v450
        %514 = vmatpush1.bf16.msra.mxu0 %v449
        %515 = vmatprep.subr.bf16.mxu0 %v452
        %516 = vmatpush1.bf16.msra.mxu0 %v451
        %517 = vmatprep.subr.bf16.mxu0 %v454
        %518 = vmatpush1.bf16.msra.mxu0 %v453
        %519 = vmatprep.subr.bf16.mxu0 %v456
        %520 = vmatpush1.bf16.msra.mxu0 %v455
        %521 = vmatprep.subr.bf16.mxu0 %v458
        %522 = vmatpush1.bf16.msra.mxu0 %v457
        %523 = vmatprep.subr.bf16.mxu0 %v460
        %524 = vmatpush1.bf16.msra.mxu0 %v459
        %525 = vmatprep.mubr.bf16.mxu0 %v330
        %526 = vmatmul.mubr.bf16.gmra.mrb[0].mxu0 %v329
        %v527 = vpop.f32.mrb[0].mxu0
        %v528 = vadd.f32 0.0, %v527
        %v529 = vpop.f32.mrb[0].mxu0
        %v530 = vadd.f32 0.0, %v529
        %v531 = vpop.f32.mrb[0].mxu0
        %v532 = vpop.f32.mrb[0].mxu0
        %533 = vdwg.mxu0
        %v534 = vadd.f32 %v291, %v528
        %v535 = vadd.f32 %v292, %v530
        %536 = vst [vmem:[%s254] sm:$0xff] %v534
        %537 = vst [vmem:[%s254 + $0x8] sm:$0xff] %v535
        %s538 = sand.u32 %s131, 1
        %s539 = scalar_lea.sflag [#allocation4], %s538
        %s540 = sand.u32 %s131, 1
        %s541 = smul.addr %s540, 16
        %s542 = scalar_lea.vmem [#allocation5], %s541
        // Predicated region
        $region41: #{parallel_linear.1} parent=31 // pred_check
          %p543 = pneg %p141
        $region42: #{parallel_linear.1} parent=31 // pred_check_branch
          %545 = sbr.rel (%p543) target = $region44
        $region43: #{parallel_linear.1} parent=31 // pred_region
          %s546 = smul.u32 2, %s26
          %s548 = ssub.s32 256, 256
          %549 = vsyncadd %s539, %s548
          %s550 = smul.addr %s25, 4
          %s551 = sadd.s32 %s546, %s550
          %s552 = smul.addr %s551, 128
          %s553 = scalar_lea.hbm %s3, %s552
          %s555 = sshll.u32 %s542, 4
          %s556 = int_to_ptr.vmem [resolvable:$true] %s555
          %558 = dma.vmem_to_hbm [thread:$0]  %s556, 256, %s553, %s539
        $region44: #{parallel_linear.1} parent=31 // pred_fallthru
          _
      $region32: #{parallel_linear.1} parent=5 // pred_fallthru
        _
      %p559 = scmp.le.s32.totalorder 2, %s15
      // Predicated region
      $region45: #{parallel_linear.1} parent=5 // pred_check
        %p560 = pneg %p559
      $region46: #{parallel_linear.1} parent=5 // pred_check_branch
        %562 = sbr.rel (%p560) target = $region48
      $region47: #{parallel_linear.1} parent=5 // pred_region
        %s563 = ssub.s32 %s15, 2
        // Predicated region
        $region49: #{parallel_linear.1} parent=47 // pred_check
          %p564 = pneg %p147
        $region50: #{parallel_linear.1} parent=47 // pred_check_branch
          %566 = sbr.rel (%p564) target = $region52
        $region51: #{parallel_linear.1} parent=47 // pred_region
          %s567 = sand.u32 %s132, 1
          %s568 = scalar_lea.sflag [#allocation4], %s567
          %s569 = sand.u32 %s132, 1
          %s570 = smul.addr %s569, 16
          %s571 = scalar_lea.vmem [#allocation5], %s570
          %572 = dma.done %s568, 256
        $region52: #{parallel_linear.1} parent=47 // pred_fallthru
          _
      $region48: #{parallel_linear.1} parent=5 // pred_fallthru
        _
    $region6: #{parallel_linear.1} parent=1 // loop_footer
      %s19 = sadd.s32 1, %s15
    $region7: #{parallel_linear.1} parent=1 // loop_footer_branch
      %14 = sbr.rel target = $region3
    $region8: #{parallel_linear.1} parent=1 // loop_exit
      _
    %573 = vsyncpa [#allocation3], 1
    %s574 = scalar_lea.sflag [#allocation3], 1
    %575 = vsyncpa %s574, 1
    %576 = vsyncpa [#allocation4], 1
    %s577 = scalar_lea.sflag [#allocation4], 1
    %578 = vsyncpa %s577, 1

</llo_original>
